<compile_context>
chip_gen: v7x
topology: tpu7x:2x2x1
jax: 0.10.0
libtpu: 0.0.40
codegen_flags: <defaults>
</compile_context>

<pallas_src>
import math
import jax
import jax.numpy as jnp
from jax.experimental import pallas as pl
from jax.experimental.pallas import tpu as pltpu


def fusion_kernel(h_ref, d_ref, w1_ref, b1_ref, w2_ref, o_ref):
    h = h_ref[...]                      # (tn, D)  input dtype (f32 here)
    d = d_ref[...]                      # (tn, D)
    b1 = b1_ref[...]                    # (1, D)   f32
    w2 = w2_ref[...]                    # (1, D)   f32  (linear2 weight row)

    tn = h.shape[0]
    mdt = w1_ref.dtype                  # MXU operand dtype (f32 or bf16)

    # Fused linear1 + tanh for both stacked embeddings: one MXU pass.
    # (If a v5e bundle dump ever shows vst saturation from this concat copy,
    #  split into two dots against the resident W1; kept fused since v6e/v7x
    #  hide the extra stores.)
    x = jnp.concatenate([h.astype(mdt), d.astype(mdt)], axis=0)       # (2*tn, D)
    t = jnp.tanh(jnp.dot(x, w1_ref[...],
                         preferred_element_type=jnp.float32) + b1)    # (2*tn, D)

    # 2-way softmax over the stack axis == sigmoid(score_h - score_d).
    # linear2 bias cancels exactly; scoring the difference halves the VPU
    # multiply and the cross-lane XLU reduce.
    s_diff = jnp.sum((t[:tn] - t[tn:]) * w2, axis=-1, keepdims=True)  # (tn, 1)
    # Sigmoid via the EUP tanh (full f32 accuracy, frees VPU divide slots).
    w_h = 0.5 * (jnp.tanh(0.5 * s_diff) + 1.0)
    w_d = 1.0 - w_h

    # Weighted sum over the stack axis (dropout is identity in eval mode).
    o_ref[...] = (w_h * h + w_d * d).astype(o_ref.dtype)


def _tpu_vmem_and_cores():
    """VMEM capacity and TensorCore count, with safe fallbacks."""
    vmem_cap, cores = 128 << 20, 1
    try:
        info = pltpu.get_tpu_info()
        vmem_cap = int(getattr(info, "vmem_capacity_bytes", vmem_cap))
        for attr in ("num_cores", "tensorcore_count", "cores_per_chip",
                     "core_count"):
            v = getattr(info, attr, None)
            if v:
                cores = int(v)
                break
    except Exception:
        pass
    return vmem_cap, cores


def _pick_row_tile(N, D, in_itemsize, w_itemsize, vmem_budget, num_cores):
    """Largest row tile (multiple of 8) fitting the per-generation VMEM
    budget; accounts for the resident W1 block and the input buffer depth."""
    n_ceil = max(8, -(-N // 8) * 8)
    in_bufs = 3 if num_cores >= 2 else 2
    tn = 8
    for t in (4096, 2048, 1024, 512, 256, 128, 64, 32, 16, 8):
        if t > n_ceil:
            continue
        need = (2 * in_bufs * t * D * in_itemsize   # h, d streaming tiles
                + 2 * t * D * in_itemsize           # out tile (double-buffered)
                + D * D * w_itemsize                # resident W1
                + 2 * D * w_itemsize                # b1, w2
                + 8 * t * D * 4)                    # f32 kernel intermediates
        if need <= vmem_budget:
            tn = t
            break
    # Keep >= 2 grid steps only on multi-TC chips (megacore sharding);
    # on single-TC chips halving the tile only shrinks DMA sizes.
    while num_cores >= 2 and tn > 8 and -(-N // tn) < 2:
        tn //= 2
    return tn


def fusion_forward(hidden, dy_emb, w1_t, b1, w2_row, *, tn=None, mxu_bf16=None):
    """hidden, dy_emb: (N, D).  w1_t: (D, D) = linear1.weight.T.
    b1: (1, D).  w2_row: (1, D) = linear2.weight (out=1).
    linear2 bias is omitted: it cancels exactly in the 2-way softmax."""
    N, D = hidden.shape
    in_itemsize = jnp.dtype(hidden.dtype).itemsize

    # bf16 MXU operands pay off once the kernel stops being HBM-bound
    # (large D); at small D keep f32 so the score path keeps full precision.
    if mxu_bf16 is None:
        mxu_bf16 = (D >= 256) and (hidden.dtype == jnp.float32)
    w1_mx = w1_t.astype(jnp.bfloat16) if mxu_bf16 else w1_t
    w_itemsize = jnp.dtype(w1_mx.dtype).itemsize

    vmem_cap, num_cores = _tpu_vmem_and_cores()
    vmem_budget = max((vmem_cap // 2) - (4 << 20), 8 << 20)
    if tn is None:
        tn = _pick_row_tile(N, D, in_itemsize, w_itemsize, vmem_budget,
                            num_cores)

    # Pad N up to a tile multiple so the grid keeps pipelining; padded rows
    # compute harmless zeros and are sliced off below.
    n_pad = -(-N // tn) * tn
    if n_pad != N:
        pad = ((0, n_pad - N), (0, 0))
        hidden_p = jnp.pad(hidden, pad)
        dy_emb_p = jnp.pad(dy_emb, pad)
    else:
        hidden_p, dy_emb_p = hidden, dy_emb
    grid = (n_pad // tn,)

    in_bufs = 3 if num_cores >= 2 else 2
    vmem_need = (2 * in_bufs * tn * D * in_itemsize
                 + 2 * tn * D * in_itemsize
                 + D * D * w_itemsize
                 + 2 * D * jnp.dtype(b1.dtype).itemsize
                 + 8 * tn * D * 4)
    # Generation-aware cap: <= half physical VMEM (32 MiB on v7x, 64 on v5e/v6e).
    vmem_limit = int(min(max(2 * vmem_need, 8 << 20), vmem_cap // 2))

    cost = pl.CostEstimate(
        flops=4 * n_pad * D * D + 12 * n_pad * D,
        transcendentals=2 * n_pad * D + n_pad,
        bytes_accessed=3 * n_pad * D * in_itemsize + (D * D + 2 * D) * w_itemsize,
    )

    w_kw = dict(pipeline_mode=pl.Buffered(1))   # grid-constant -> resident
    in_kw = dict(pipeline_mode=pl.Buffered(3)) if num_cores >= 2 else {}

    out = pl.pallas_call(
        fusion_kernel,
        out_shape=jax.ShapeDtypeStruct((n_pad, D), hidden.dtype),
        grid_spec=pltpu.PrefetchScalarGridSpec(
            num_scalar_prefetch=0,
            grid=grid,
            in_specs=[
                pl.BlockSpec((tn, D), lambda i: (i, 0), **in_kw),   # hidden rows
                pl.BlockSpec((tn, D), lambda i: (i, 0), **in_kw),   # dy_emb rows
                pl.BlockSpec((D, D), lambda i: (0, 0), **w_kw),     # W1^T (resident)
                pl.BlockSpec((1, D), lambda i: (0, 0), **w_kw),     # b1
                pl.BlockSpec((1, D), lambda i: (0, 0), **w_kw),     # W2 row
            ],
            out_specs=pl.BlockSpec((tn, D), lambda i: (i, 0)),
        ),
        compiler_params=pltpu.CompilerParams(
            dimension_semantics=("parallel",),
            vmem_limit_bytes=vmem_limit),
        cost_estimate=cost,
    )(hidden_p, dy_emb_p, w1_mx, b1, w2_row)

    return out[:N] if n_pad != N else out


def init_params(key, input_size, out=1):
    """Deterministic init matching the PyTorch module's shapes:
       linear1: (D, D) xavier_normal weight, default-uniform bias
       linear2: (out, D) xavier_normal weight, default-uniform bias"""
    k1, k2, k3, k4 = jax.random.split(key, 4)
    D = input_size
    std1 = math.sqrt(2.0 / (D + D))
    std2 = math.sqrt(2.0 / (D + out))
    w1 = std1 * jax.random.normal(k1, (D, D), jnp.float32)      # (out_f, in_f)
    w2 = std2 * jax.random.normal(k2, (out, D), jnp.float32)    # (out_f, in_f)
    bound = 1.0 / math.sqrt(D)
    b1 = jax.random.uniform(k3, (D,), jnp.float32, -bound, bound)
    b2 = jax.random.uniform(k4, (out,), jnp.float32, -bound, bound)
    return w1, b1, w2, b2


def reference_forward(hidden, dy_emb, w1, b1, w2, b2):
    """Pure-JAX reference mirroring the PyTorch forward (eval mode)."""
    emb = jnp.stack([hidden, dy_emb], axis=0)                    # (2, N, D)
    h1 = jnp.tanh(emb @ w1.T + b1)                               # (2, N, D)
    score = h1 @ w2.T + b2                                       # (2, N, 1)
    score = jax.nn.softmax(score, axis=0)
    return jnp.sum(score * emb, axis=0)                          # (N, D)


if __name__ == "__main__":
    key = jax.random.PRNGKey(0)
    kh, kd, kp = jax.random.split(key, 3)
    D = 128
    w1, b1, w2, b2 = init_params(kp, D, out=1)

    # N=256: lane/sublane-aligned path.  N=200: exercises the padded cdiv grid.
    for N in (256, 200):
        hidden = jax.random.normal(jax.random.fold_in(kh, N), (N, D), jnp.float32)
        dy_emb = jax.random.normal(jax.random.fold_in(kd, N), (N, D), jnp.float32)

        out = fusion_forward(
            hidden, dy_emb,
            w1.T,                      # (D, D) so the kernel computes x @ W1^T
            b1.reshape(1, D),
            w2.reshape(1, D),          # out=1 -> single weight row
        )
        out = jax.block_until_ready(out)

        ref = reference_forward(hidden, dy_emb, w1, b1, w2, b2)
        assert out.shape == (N, D)
        assert jnp.allclose(out, ref, atol=1e-4, rtol=1e-4), \
            f"mismatch vs reference (N={N})"
    print("KERNEL_OK")
</pallas_src>

<mosaic_0001>
module attributes {stable_mosaic.version = 11 : i64} {
  func.func @fusion_kernel(%arg0: i32, %arg1: memref<256x128xf32, #tpu.memory_space<vmem>>, %arg2: memref<256x128xf32, #tpu.memory_space<vmem>>, %arg3: memref<128x128xf32, #tpu.memory_space<vmem>>, %arg4: memref<1x128xf32, #tpu.memory_space<vmem>>, %arg5: memref<1x128xf32, #tpu.memory_space<vmem>>, %arg6: memref<256x128xf32, #tpu.memory_space<vmem>>) attributes {dimension_semantics = [#tpu.dimension_semantics<parallel>], iteration_bounds = array<i64: 1>, scalar_prefetch = 0 : i64, scratch_operands = 0 : i64, tpu.core_type = #tpu.core_type<tc>, window_params = [{transform_indices = @transform_0, window_bounds = array<i64: 256, 128>}, {transform_indices = @transform_1, window_bounds = array<i64: 256, 128>}, {pipeline_mode = #tpu.pipeline_mode<synchronous>, transform_indices = @transform_2, window_bounds = array<i64: 128, 128>}, {pipeline_mode = #tpu.pipeline_mode<synchronous>, transform_indices = @transform_3, window_bounds = array<i64: 1, 128>}, {pipeline_mode = #tpu.pipeline_mode<synchronous>, transform_indices = @transform_4, window_bounds = array<i64: 1, 128>}, {transform_indices = @transform_5, window_bounds = array<i64: 256, 128>}]} {
    %c0 = arith.constant 0 : index
    %c0_0 = arith.constant 0 : index
    %0 = vector.load %arg1[%c0, %c0_0] : memref<256x128xf32, #tpu.memory_space<vmem>>, vector<256x128xf32>
    %c0_1 = arith.constant 0 : index
    %c0_2 = arith.constant 0 : index
    %1 = vector.load %arg2[%c0_1, %c0_2] : memref<256x128xf32, #tpu.memory_space<vmem>>, vector<256x128xf32>
    %c0_3 = arith.constant 0 : index
    %c0_4 = arith.constant 0 : index
    %2 = vector.load %arg4[%c0_3, %c0_4] : memref<1x128xf32, #tpu.memory_space<vmem>>, vector<1x128xf32>
    %c0_5 = arith.constant 0 : index
    %c0_6 = arith.constant 0 : index
    %3 = vector.load %arg5[%c0_5, %c0_6] : memref<1x128xf32, #tpu.memory_space<vmem>>, vector<1x128xf32>
    %4 = tpu.concatenate %0, %1 in 0 : vector<256x128xf32>, vector<256x128xf32> -> vector<512x128xf32>
    %c0_7 = arith.constant 0 : index
    %c0_8 = arith.constant 0 : index
    %5 = vector.load %arg3[%c0_7, %c0_8] : memref<128x128xf32, #tpu.memory_space<vmem>>, vector<128x128xf32>
    %cst = arith.constant dense<0.000000e+00> : vector<512x128xf32>
    %6 = tpu.matmul %4, %5, %cst {dimension_numbers = #tpu.dot_dimension_numbers<[1], [0], [0], [1], [0, 0, 1, 1], [], []>} : vector<512x128xf32>, vector<128x128xf32>, vector<512x128xf32> -> vector<512x128xf32>
    %7 = vector.broadcast %2 : vector<1x128xf32> to vector<512x128xf32>
    %8 = arith.addf %6, %7 : vector<512x128xf32>
    %9 = math.tanh %8 : vector<512x128xf32>
    %10 = vector.extract_strided_slice %9 {offsets = [0, 0], sizes = [256, 128], strides = [1, 1]} : vector<512x128xf32> to vector<256x128xf32>
    %11 = vector.extract_strided_slice %9 {offsets = [256, 0], sizes = [256, 128], strides = [1, 1]} : vector<512x128xf32> to vector<256x128xf32>
    %12 = arith.subf %10, %11 : vector<256x128xf32>
    %13 = vector.broadcast %3 : vector<1x128xf32> to vector<256x128xf32>
    %14 = arith.mulf %12, %13 : vector<256x128xf32>
    %cst_9 = arith.constant dense<0.000000e+00> : vector<256xf32>
    %15 = vector.multi_reduction <add>, %14, %cst_9 [1] : vector<256x128xf32> to vector<256xf32>
    %16 = vector.shape_cast %15 : vector<256xf32> to vector<256x1xf32>
    %cst_10 = arith.constant 5.000000e-01 : f32
    %17 = vector.broadcast %cst_10 : f32 to vector<256x1xf32>
    %18 = arith.mulf %17, %16 : vector<256x1xf32>
    %19 = math.tanh %18 : vector<256x1xf32>
    %cst_11 = arith.constant 1.000000e+00 : f32
    %20 = vector.broadcast %cst_11 : f32 to vector<256x1xf32>
    %21 = arith.addf %19, %20 : vector<256x1xf32>
    %cst_12 = arith.constant 5.000000e-01 : f32
    %22 = vector.broadcast %cst_12 : f32 to vector<256x1xf32>
    %23 = arith.mulf %22, %21 : vector<256x1xf32>
    %cst_13 = arith.constant 1.000000e+00 : f32
    %24 = vector.broadcast %cst_13 : f32 to vector<256x1xf32>
    %25 = arith.subf %24, %23 : vector<256x1xf32>
    %26 = vector.broadcast %23 : vector<256x1xf32> to vector<256x128xf32>
    %27 = arith.mulf %26, %0 : vector<256x128xf32>
    %28 = vector.broadcast %25 : vector<256x1xf32> to vector<256x128xf32>
    %29 = arith.mulf %28, %1 : vector<256x128xf32>
    %30 = arith.addf %27, %29 : vector<256x128xf32>
    %c0_14 = arith.constant 0 : index
    %c0_15 = arith.constant 0 : index
    %31 = vector.load %arg6[%c0_14, %c0_15] : memref<256x128xf32, #tpu.memory_space<vmem>>, vector<256x128xf32>
    tpu.vector_store %arg6[%c0_14, %c0_15], %30 {strides = array<i32>} : memref<256x128xf32, #tpu.memory_space<vmem>>, vector<256x128xf32>,
    return
  }
  func.func @transform_0(%arg0: i32) -> (i32, i32) {
    %c0_i32 = arith.constant 0 : i32
    %c0_i32_0 = arith.constant 0 : i32
    return %arg0, %c0_i32 : i32, i32
  }
  func.func @transform_1(%arg0: i32) -> (i32, i32) {
    %c0_i32 = arith.constant 0 : i32
    %c0_i32_0 = arith.constant 0 : i32
    return %arg0, %c0_i32 : i32, i32
  }
  func.func @transform_2(%arg0: i32) -> (i32, i32) {
    %c0_i32 = arith.constant 0 : i32
    %c0_i32_0 = arith.constant 0 : i32
    %c0_i32_1 = arith.constant 0 : i32
    return %c0_i32, %c0_i32_0 : i32, i32
  }
  func.func @transform_3(%arg0: i32) -> (i32, i32) {
    %c0_i32 = arith.constant 0 : i32
    %c0_i32_0 = arith.constant 0 : i32
    %c0_i32_1 = arith.constant 0 : i32
    return %c0_i32, %c0_i32_0 : i32, i32
  }
  func.func @transform_4(%arg0: i32) -> (i32, i32) {
    %c0_i32 = arith.constant 0 : i32
    %c0_i32_0 = arith.constant 0 : i32
    %c0_i32_1 = arith.constant 0 : i32
    return %c0_i32, %c0_i32_0 : i32, i32
  }
  func.func @transform_5(%arg0: i32) -> (i32, i32) {
    %c0_i32 = arith.constant 0 : i32
    %c0_i32_0 = arith.constant 0 : i32
    return %arg0, %c0_i32 : i32, i32
  }
}

</mosaic_0001>

<llo_original>
// kernel: tpu_custom_call.1
$region0: #{tpu_custom_call.1}
  #allocation0 [shape = 'u32[]', space=smem, size = 0x4, offset = 0x4, fixed_abs, tag = 'smem constant byte address 0x4 - core index']
  #allocation1 [shape = 'u32[144,128]{1,0:T(1,128)}', space=vmem, size = 0x12000, scoped, tag = 'internal scratch']
  %s0 = inlined_call_operand.hbm [shape: f32[256,128], index: 0, kind: input, shape index: {}]
  %s1 = inlined_call_operand.hbm [shape: f32[256,128], index: 1, kind: input, shape index: {}]
  %s2 = inlined_call_operand.hbm [shape: f32[128,128], index: 2, kind: input, shape index: {}]
  %s3 = inlined_call_operand.vmem [shape: f32[1,128], index: 3, kind: input, shape index: {}]
  %s4 = inlined_call_operand.vmem [shape: f32[1,128], index: 4, kind: input, shape index: {}]
  %s5 = inlined_call_operand.hbm [shape: f32[256,128], index: 5, kind: output, shape index: {}]
  %s6 = sld [smem:[#allocation0]]
  $region42: #{tpu_custom_call.1} parent=0
    _
  %s8 = ssub.s32 1, %s6
  %s9 = scalar_select 0, %s8, %s6
  $region1: #{tpu_custom_call.1} parent=0
    #allocation2 [shape = 'u8[131072]{0}', space=vmem, size = 0x20000, scoped, tag = 'input window, operand 0, single buffered']
    #allocation3 [shape = 's32[1]{0}', space=sflag, size = 0x4, scoped, tag = 'scoped memory for tpu_custom_call.1']
    #allocation4 [shape = 's32[1]{0}', space=sflag, size = 0x4, scoped, tag = 'scoped memory for tpu_custom_call.1']
    #allocation5 [shape = 'u8[131072]{0}', space=vmem, size = 0x20000, scoped, tag = 'input window, operand 1, single buffered']
    #allocation6 [shape = 's32[1]{0}', space=sflag, size = 0x4, scoped, tag = 'scoped memory for tpu_custom_call.1']
    #allocation7 [shape = 'u8[65536]{0}', space=vmem, size = 0x10000, scoped, tag = 'input window, operand 2, single buffered']
    #allocation8 [shape = 'u8[131072]{0}', space=vmem, size = 0x20000, scoped, tag = 'output window, operand 0, single buffered']
    %10 = vsyncpa [#allocation3], 0
    %11 = vsyncpa [#allocation6], 0
    %12 = vsyncpa [#allocation4], 0
    // Predicated region
    $region2: #{tpu_custom_call.1} parent=1 // pred_check
      _
    $region3: #{tpu_custom_call.1} parent=1 // pred_check_branch
      %14 = sbr.rel (0) target = $region5
    $region4: #{tpu_custom_call.1} parent=1 // pred_region
      %s16 = ssub.s32 4096, 4096
      %17 = vsyncadd [#allocation3], %s16
      %s18 = sshll.u32 [#allocation2], 4
      %s19 = int_to_ptr.vmem [resolvable:$true] %s18
      %24 = dma.hbm_to_vmem [thread:$0]  %s0, 4096, %s19, [#allocation3], 128, 128, 8
    $region5: #{tpu_custom_call.1} parent=1 // pred_fallthru
      _
    // Predicated region
    $region6: #{tpu_custom_call.1} parent=1 // pred_check
      _
    $region7: #{tpu_custom_call.1} parent=1 // pred_check_branch
      %26 = sbr.rel (0) target = $region9
    $region8: #{tpu_custom_call.1} parent=1 // pred_region
      %s28 = ssub.s32 4096, 4096
      %29 = vsyncadd [#allocation6], %s28
      %s30 = sshll.u32 [#allocation5], 4
      %s31 = int_to_ptr.vmem [resolvable:$true] %s30
      %36 = dma.hbm_to_vmem [thread:$0]  %s1, 4096, %s31, [#allocation6], 128, 128, 8
    $region9: #{tpu_custom_call.1} parent=1 // pred_fallthru
      _
    // Predicated region
    $region10: #{tpu_custom_call.1} parent=1 // pred_check
      _
    $region11: #{tpu_custom_call.1} parent=1 // pred_check_branch
      %38 = sbr.rel (0) target = $region13
    $region12: #{tpu_custom_call.1} parent=1 // pred_region
      %s40 = ssub.s32 2048, 2048
      %41 = vsyncadd [#allocation6], %s40
      %s42 = sshll.u32 [#allocation7], 4
      %s43 = int_to_ptr.vmem [resolvable:$true] %s42
      %48 = dma.hbm_to_vmem [thread:$0]  %s2, 2048, %s43, [#allocation6], 128, 128, 8
    $region13: #{tpu_custom_call.1} parent=1 // pred_fallthru
      _
    // Predicated region
    $region14: #{tpu_custom_call.1} parent=1 // pred_check
      _
    $region15: #{tpu_custom_call.1} parent=1 // pred_check_branch
      %50 = sbr.rel (0) target = $region17
    $region16: #{tpu_custom_call.1} parent=1 // pred_region
      _
    $region17: #{tpu_custom_call.1} parent=1 // pred_fallthru
      _
    // Predicated region
    $region18: #{tpu_custom_call.1} parent=1 // pred_check
      _
    $region19: #{tpu_custom_call.1} parent=1 // pred_check_branch
      %52 = sbr.rel (0) target = $region21
    $region20: #{tpu_custom_call.1} parent=1 // pred_region
      _
    $region21: #{tpu_custom_call.1} parent=1 // pred_fallthru
      _
    // Predicated region
    $region22: #{tpu_custom_call.1} parent=1 // pred_check
      _
    $region23: #{tpu_custom_call.1} parent=1 // pred_check_branch
      %54 = sbr.rel (0) target = $region25
    $region24: #{tpu_custom_call.1} parent=1 // pred_region
      %55 = dma.done [#allocation3], 4096
    $region25: #{tpu_custom_call.1} parent=1 // pred_fallthru
      _
    // Predicated region
    $region26: #{tpu_custom_call.1} parent=1 // pred_check
      _
    $region27: #{tpu_custom_call.1} parent=1 // pred_check_branch
      %57 = sbr.rel (0) target = $region29
    $region28: #{tpu_custom_call.1} parent=1 // pred_region
      %58 = dma.done [#allocation6], 4096
    $region29: #{tpu_custom_call.1} parent=1 // pred_fallthru
      _
    // Predicated region
    $region30: #{tpu_custom_call.1} parent=1 // pred_check
      _
    $region31: #{tpu_custom_call.1} parent=1 // pred_check_branch
      %60 = sbr.rel (0) target = $region33
    $region32: #{tpu_custom_call.1} parent=1 // pred_region
      %61 = dma.done [#allocation6], 2048
    $region33: #{tpu_custom_call.1} parent=1 // pred_fallthru
      _
    %v62 = vld [vmem:[#allocation2] sm:$0xff]
    %v63 = vld [vmem:[#allocation2 + $0x8] sm:$0xff]
    %v64 = vld [vmem:[#allocation2 + $0x10] sm:$0xff]
    %v65 = vld [vmem:[#allocation2 + $0x18] sm:$0xff]
    %v66 = vld [vmem:[#allocation2 + $0x20] sm:$0xff]
    %v67 = vld [vmem:[#allocation2 + $0x28] sm:$0xff]
    %v68 = vld [vmem:[#allocation2 + $0x30] sm:$0xff]
    %v69 = vld [vmem:[#allocation2 + $0x38] sm:$0xff]
    %v70 = vld [vmem:[#allocation2 + $0x40] sm:$0xff]
    %v71 = vld [vmem:[#allocation2 + $0x48] sm:$0xff]
    %v72 = vld [vmem:[#allocation2 + $0x50] sm:$0xff]
    %v73 = vld [vmem:[#allocation2 + $0x58] sm:$0xff]
    %v74 = vld [vmem:[#allocation2 + $0x60] sm:$0xff]
    %v75 = vld [vmem:[#allocation2 + $0x68] sm:$0xff]
    %v76 = vld [vmem:[#allocation2 + $0x70] sm:$0xff]
    %v77 = vld [vmem:[#allocation2 + $0x78] sm:$0xff]
    %v78 = vld [vmem:[#allocation2 + $0x80] sm:$0xff]
    %v79 = vld [vmem:[#allocation2 + $0x88] sm:$0xff]
    %v80 = vld [vmem:[#allocation2 + $0x90] sm:$0xff]
    %v81 = vld [vmem:[#allocation2 + $0x98] sm:$0xff]
    %v82 = vld [vmem:[#allocation2 + $0xa0] sm:$0xff]
    %v83 = vld [vmem:[#allocation2 + $0xa8] sm:$0xff]
    %v84 = vld [vmem:[#allocation2 + $0xb0] sm:$0xff]
    %v85 = vld [vmem:[#allocation2 + $0xb8] sm:$0xff]
    %v86 = vld [vmem:[#allocation2 + $0xc0] sm:$0xff]
    %v87 = vld [vmem:[#allocation2 + $0xc8] sm:$0xff]
    %v88 = vld [vmem:[#allocation2 + $0xd0] sm:$0xff]
    %v89 = vld [vmem:[#allocation2 + $0xd8] sm:$0xff]
    %v90 = vld [vmem:[#allocation2 + $0xe0] sm:$0xff]
    %v91 = vld [vmem:[#allocation2 + $0xe8] sm:$0xff]
    %v92 = vld [vmem:[#allocation2 + $0xf0] sm:$0xff]
    %v93 = vld [vmem:[#allocation2 + $0xf8] sm:$0xff]
    %v94 = vld [vmem:[#allocation5] sm:$0xff]
    %v95 = vld [vmem:[#allocation5 + $0x8] sm:$0xff]
    %v96 = vld [vmem:[#allocation5 + $0x10] sm:$0xff]
    %v97 = vld [vmem:[#allocation5 + $0x18] sm:$0xff]
    %v98 = vld [vmem:[#allocation5 + $0x20] sm:$0xff]
    %v99 = vld [vmem:[#allocation5 + $0x28] sm:$0xff]
    %v100 = vld [vmem:[#allocation5 + $0x30] sm:$0xff]
    %v101 = vld [vmem:[#allocation5 + $0x38] sm:$0xff]
    %v102 = vld [vmem:[#allocation5 + $0x40] sm:$0xff]
    %v103 = vld [vmem:[#allocation5 + $0x48] sm:$0xff]
    %v104 = vld [vmem:[#allocation5 + $0x50] sm:$0xff]
    %v105 = vld [vmem:[#allocation5 + $0x58] sm:$0xff]
    %v106 = vld [vmem:[#allocation5 + $0x60] sm:$0xff]
    %v107 = vld [vmem:[#allocation5 + $0x68] sm:$0xff]
    %v108 = vld [vmem:[#allocation5 + $0x70] sm:$0xff]
    %v109 = vld [vmem:[#allocation5 + $0x78] sm:$0xff]
    %v110 = vld [vmem:[#allocation5 + $0x80] sm:$0xff]
    %v111 = vld [vmem:[#allocation5 + $0x88] sm:$0xff]
    %v112 = vld [vmem:[#allocation5 + $0x90] sm:$0xff]
    %v113 = vld [vmem:[#allocation5 + $0x98] sm:$0xff]
    %v114 = vld [vmem:[#allocation5 + $0xa0] sm:$0xff]
    %v115 = vld [vmem:[#allocation5 + $0xa8] sm:$0xff]
    %v116 = vld [vmem:[#allocation5 + $0xb0] sm:$0xff]
    %v117 = vld [vmem:[#allocation5 + $0xb8] sm:$0xff]
    %v118 = vld [vmem:[#allocation5 + $0xc0] sm:$0xff]
    %v119 = vld [vmem:[#allocation5 + $0xc8] sm:$0xff]
    %v120 = vld [vmem:[#allocation5 + $0xd0] sm:$0xff]
    %v121 = vld [vmem:[#allocation5 + $0xd8] sm:$0xff]
    %v122 = vld [vmem:[#allocation5 + $0xe0] sm:$0xff]
    %v123 = vld [vmem:[#allocation5 + $0xe8] sm:$0xff]
    %v124 = vld [vmem:[#allocation5 + $0xf0] sm:$0xff]
    %v125 = vld [vmem:[#allocation5 + $0xf8] sm:$0xff]
    %v126 = vld [vmem:[%s3] sm:$0x1]
    %v127 = vld [vmem:[%s4] sm:$0x1]
    %v128 = vld [vmem:[#allocation7] sm:$0xff]
    %v129 = vld [vmem:[#allocation7 + $0x8] sm:$0xff]
    %v130 = vld [vmem:[#allocation7 + $0x10] sm:$0xff]
    %v131 = vld [vmem:[#allocation7 + $0x18] sm:$0xff]
    %v132 = vld [vmem:[#allocation7 + $0x20] sm:$0xff]
    %v133 = vld [vmem:[#allocation7 + $0x28] sm:$0xff]
    %v134 = vld [vmem:[#allocation7 + $0x30] sm:$0xff]
    %v135 = vld [vmem:[#allocation7 + $0x38] sm:$0xff]
    %v136 = vld [vmem:[#allocation7 + $0x40] sm:$0xff]
    %v137 = vld [vmem:[#allocation7 + $0x48] sm:$0xff]
    %v138 = vld [vmem:[#allocation7 + $0x50] sm:$0xff]
    %v139 = vld [vmem:[#allocation7 + $0x58] sm:$0xff]
    %v140 = vld [vmem:[#allocation7 + $0x60] sm:$0xff]
    %v141 = vld [vmem:[#allocation7 + $0x68] sm:$0xff]
    %v142 = vld [vmem:[#allocation7 + $0x70] sm:$0xff]
    %v143 = vld [vmem:[#allocation7 + $0x78] sm:$0xff]
    %v145 = vlaneseq
    %v146 = vshrl.u32 %v145, 7
    %v147 = vsub.s32 0, %v146
    %v148 = vrot.slane %v126, %v147
    %150 = vmatprep.subr.mxu0 0.0
    %151 = vmatpush1.msra.mxu0 %v128
    %152 = vmatprep.subr.mxu0 0.0
    %153 = vmatpush1.msra.mxu0 %v129
    %154 = vmatprep.subr.mxu0 0.0
    %155 = vmatpush1.msra.mxu0 %v130
    %156 = vmatprep.subr.mxu0 0.0
    %157 = vmatpush1.msra.mxu0 %v131
    %158 = vmatprep.subr.mxu0 0.0
    %159 = vmatpush1.msra.mxu0 %v132
    %160 = vmatprep.subr.mxu0 0.0
    %161 = vmatpush1.msra.mxu0 %v133
    %162 = vmatprep.subr.mxu0 0.0
    %163 = vmatpush1.msra.mxu0 %v134
    %164 = vmatprep.subr.mxu0 0.0
    %165 = vmatpush1.msra.mxu0 %v135
    %166 = vmatprep.subr.mxu0 0.0
    %167 = vmatpush1.msra.mxu0 %v136
    %168 = vmatprep.subr.mxu0 0.0
    %169 = vmatpush1.msra.mxu0 %v137
    %170 = vmatprep.subr.mxu0 0.0
    %171 = vmatpush1.msra.mxu0 %v138
    %172 = vmatprep.subr.mxu0 0.0
    %173 = vmatpush1.msra.mxu0 %v139
    %174 = vmatprep.subr.mxu0 0.0
    %175 = vmatpush1.msra.mxu0 %v140
    %176 = vmatprep.subr.mxu0 0.0
    %177 = vmatpush1.msra.mxu0 %v141
    %178 = vmatprep.subr.mxu0 0.0
    %179 = vmatpush1.msra.mxu0 %v142
    %180 = vmatprep.subr.mxu0 0.0
    %181 = vmatpush1.msra.mxu0 %v143
    %182 = vmatprep.subr.mxu0 0.0
    %183 = vmatpush1.msra.mxu0 0.0
    %184 = vmatprep.subr.mxu0 0.0
    %185 = vmatpush1.msra.mxu0 0.0
    %186 = vmatprep.subr.mxu0 0.0
    %187 = vmatpush1.msra.mxu0 0.0
    %188 = vmatprep.subr.mxu0 0.0
    %189 = vmatpush1.msra.mxu0 0.0
    %190 = vmatprep.subr.mxu0 0.0
    %191 = vmatpush1.msra.mxu0 0.0
    %192 = vmatprep.subr.mxu0 0.0
    %193 = vmatpush1.msra.mxu0 0.0
    %194 = vmatprep.subr.mxu0 0.0
    %195 = vmatpush1.msra.mxu0 0.0
    %196 = vmatprep.subr.mxu0 0.0
    %197 = vmatpush1.msra.mxu0 0.0
    %198 = vmatprep.subr.mxu0 0.0
    %199 = vmatpush1.msra.mxu0 0.0
    %200 = vmatprep.subr.mxu0 0.0
    %201 = vmatpush1.msra.mxu0 0.0
    %202 = vmatprep.subr.mxu0 0.0
    %203 = vmatpush1.msra.mxu0 0.0
    %204 = vmatprep.subr.mxu0 0.0
    %205 = vmatpush1.msra.mxu0 0.0
    %206 = vmatprep.subr.mxu0 0.0
    %207 = vmatpush1.msra.mxu0 0.0
    %208 = vmatprep.subr.mxu0 0.0
    %209 = vmatpush1.msra.mxu0 0.0
    %210 = vmatprep.subr.mxu0 0.0
    %211 = vmatpush1.msra.mxu0 0.0
    %212 = vmatprep.subr.mxu0 0.0
    %213 = vmatpush1.msra.mxu0 0.0
    %214 = vmatprep.mubr.f32.mxu0 0.0
    %215 = vmatmul.mubr.f32.gmra.mrb[0].mxu0 %v62
    %v216 = vpop.f32.mrb[0].mxu0
    %v217 = vadd.f32 %v148, %v216
    %v218 = vpop.f32.mrb[0].mxu0
    %219 = vmatprep.mubr.f32.mxu0 0.0
    %220 = vmatmul.mubr.f32.gmra.mrb[0].mxu0 %v63
    %v221 = vpop.f32.mrb[0].mxu0
    %v222 = vadd.f32 %v148, %v221
    %v223 = vpop.f32.mrb[0].mxu0
    %224 = vmatprep.mubr.f32.mxu0 0.0
    %225 = vmatmul.mubr.f32.gmra.mrb[0].mxu0 %v64
    %v226 = vpop.f32.mrb[0].mxu0
    %v227 = vadd.f32 %v148, %v226
    %v228 = vpop.f32.mrb[0].mxu0
    %229 = vmatprep.mubr.f32.mxu0 0.0
    %230 = vmatmul.mubr.f32.gmra.mrb[0].mxu0 %v65
    %v231 = vpop.f32.mrb[0].mxu0
    %v232 = vadd.f32 %v148, %v231
    %v233 = vpop.f32.mrb[0].mxu0
    %234 = vmatprep.mubr.f32.mxu0 0.0
    %235 = vmatmul.mubr.f32.gmra.mrb[0].mxu0 %v66
    %v236 = vpop.f32.mrb[0].mxu0
    %v237 = vadd.f32 %v148, %v236
    %v238 = vpop.f32.mrb[0].mxu0
    %239 = vmatprep.mubr.f32.mxu0 0.0
    %240 = vmatmul.mubr.f32.gmra.mrb[0].mxu0 %v67
    %v241 = vpop.f32.mrb[0].mxu0
    %v242 = vadd.f32 %v148, %v241
    %v243 = vpop.f32.mrb[0].mxu0
    %244 = vmatprep.mubr.f32.mxu0 0.0
    %245 = vmatmul.mubr.f32.gmra.mrb[0].mxu0 %v68
    %v246 = vpop.f32.mrb[0].mxu0
    %v247 = vadd.f32 %v148, %v246
    %v248 = vpop.f32.mrb[0].mxu0
    %249 = vmatprep.mubr.f32.mxu0 0.0
    %250 = vmatmul.mubr.f32.gmra.mrb[0].mxu0 %v69
    %v251 = vpop.f32.mrb[0].mxu0
    %v252 = vadd.f32 %v148, %v251
    %v253 = vpop.f32.mrb[0].mxu0
    %254 = vmatprep.mubr.f32.mxu0 0.0
    %255 = vmatmul.mubr.f32.gmra.mrb[0].mxu0 %v70
    %v256 = vpop.f32.mrb[0].mxu0
    %v257 = vadd.f32 %v148, %v256
    %v258 = vpop.f32.mrb[0].mxu0
    %259 = vmatprep.mubr.f32.mxu0 0.0
    %260 = vmatmul.mubr.f32.gmra.mrb[0].mxu0 %v71
    %v261 = vpop.f32.mrb[0].mxu0
    %v262 = vadd.f32 %v148, %v261
    %v263 = vpop.f32.mrb[0].mxu0
    %264 = vmatprep.mubr.f32.mxu0 0.0
    %265 = vmatmul.mubr.f32.gmra.mrb[0].mxu0 %v72
    %v266 = vpop.f32.mrb[0].mxu0
    %v267 = vadd.f32 %v148, %v266
    %v268 = vpop.f32.mrb[0].mxu0
    %269 = vmatprep.mubr.f32.mxu0 0.0
    %270 = vmatmul.mubr.f32.gmra.mrb[0].mxu0 %v73
    %v271 = vpop.f32.mrb[0].mxu0
    %v272 = vadd.f32 %v148, %v271
    %v273 = vpop.f32.mrb[0].mxu0
    %274 = vmatprep.mubr.f32.mxu0 0.0
    %275 = vmatmul.mubr.f32.gmra.mrb[0].mxu0 %v74
    %v276 = vpop.f32.mrb[0].mxu0
    %v277 = vadd.f32 %v148, %v276
    %v278 = vpop.f32.mrb[0].mxu0
    %279 = vmatprep.mubr.f32.mxu0 0.0
    %280 = vmatmul.mubr.f32.gmra.mrb[0].mxu0 %v75
    %v281 = vpop.f32.mrb[0].mxu0
    %v282 = vadd.f32 %v148, %v281
    %v283 = vpop.f32.mrb[0].mxu0
    %284 = vmatprep.mubr.f32.mxu0 0.0
    %285 = vmatmul.mubr.f32.gmra.mrb[0].mxu0 %v76
    %v286 = vpop.f32.mrb[0].mxu0
    %v287 = vadd.f32 %v148, %v286
    %v288 = vpop.f32.mrb[0].mxu0
    %289 = vmatprep.mubr.f32.mxu0 0.0
    %290 = vmatmul.mubr.f32.gmra.mrb[0].mxu0 %v77
    %v291 = vpop.f32.mrb[0].mxu0
    %v292 = vadd.f32 %v148, %v291
    %v293 = vpop.f32.mrb[0].mxu0
    %294 = vmatprep.mubr.f32.mxu0 0.0
    %295 = vmatmul.mubr.f32.gmra.mrb[0].mxu0 %v78
    %v296 = vpop.f32.mrb[0].mxu0
    %v297 = vadd.f32 %v148, %v296
    %v298 = vpop.f32.mrb[0].mxu0
    %299 = vmatprep.mubr.f32.mxu0 0.0
    %300 = vmatmul.mubr.f32.gmra.mrb[0].mxu0 %v79
    %v301 = vpop.f32.mrb[0].mxu0
    %v302 = vadd.f32 %v148, %v301
    %v303 = vpop.f32.mrb[0].mxu0
    %304 = vmatprep.mubr.f32.mxu0 0.0
    %305 = vmatmul.mubr.f32.gmra.mrb[0].mxu0 %v80
    %v306 = vpop.f32.mrb[0].mxu0
    %v307 = vadd.f32 %v148, %v306
    %v308 = vpop.f32.mrb[0].mxu0
    %309 = vmatprep.mubr.f32.mxu0 0.0
    %310 = vmatmul.mubr.f32.gmra.mrb[0].mxu0 %v81
    %v311 = vpop.f32.mrb[0].mxu0
    %v312 = vadd.f32 %v148, %v311
    %v313 = vpop.f32.mrb[0].mxu0
    %314 = vmatprep.mubr.f32.mxu0 0.0
    %315 = vmatmul.mubr.f32.gmra.mrb[0].mxu0 %v82
    %v316 = vpop.f32.mrb[0].mxu0
    %v317 = vadd.f32 %v148, %v316
    %v318 = vpop.f32.mrb[0].mxu0
    %319 = vmatprep.mubr.f32.mxu0 0.0
    %320 = vmatmul.mubr.f32.gmra.mrb[0].mxu0 %v83
    %v321 = vpop.f32.mrb[0].mxu0
    %v322 = vadd.f32 %v148, %v321
    %v323 = vpop.f32.mrb[0].mxu0
    %324 = vmatprep.mubr.f32.mxu0 0.0
    %325 = vmatmul.mubr.f32.gmra.mrb[0].mxu0 %v84
    %v326 = vpop.f32.mrb[0].mxu0
    %v327 = vadd.f32 %v148, %v326
    %v328 = vpop.f32.mrb[0].mxu0
    %329 = vmatprep.mubr.f32.mxu0 0.0
    %330 = vmatmul.mubr.f32.gmra.mrb[0].mxu0 %v85
    %v331 = vpop.f32.mrb[0].mxu0
    %v332 = vadd.f32 %v148, %v331
    %v333 = vpop.f32.mrb[0].mxu0
    %334 = vmatprep.mubr.f32.mxu0 0.0
    %335 = vmatmul.mubr.f32.gmra.mrb[0].mxu0 %v86
    %v336 = vpop.f32.mrb[0].mxu0
    %v337 = vadd.f32 %v148, %v336
    %v338 = vpop.f32.mrb[0].mxu0
    %339 = vmatprep.mubr.f32.mxu0 0.0
    %340 = vmatmul.mubr.f32.gmra.mrb[0].mxu0 %v87
    %v341 = vpop.f32.mrb[0].mxu0
    %v342 = vadd.f32 %v148, %v341
    %v343 = vpop.f32.mrb[0].mxu0
    %344 = vmatprep.mubr.f32.mxu0 0.0
    %345 = vmatmul.mubr.f32.gmra.mrb[0].mxu0 %v88
    %v346 = vpop.f32.mrb[0].mxu0
    %v347 = vadd.f32 %v148, %v346
    %v348 = vpop.f32.mrb[0].mxu0
    %349 = vmatprep.mubr.f32.mxu0 0.0
    %350 = vmatmul.mubr.f32.gmra.mrb[0].mxu0 %v89
    %v351 = vpop.f32.mrb[0].mxu0
    %v352 = vadd.f32 %v148, %v351
    %v353 = vpop.f32.mrb[0].mxu0
    %354 = vmatprep.mubr.f32.mxu0 0.0
    %355 = vmatmul.mubr.f32.gmra.mrb[0].mxu0 %v90
    %v356 = vpop.f32.mrb[0].mxu0
    %v357 = vadd.f32 %v148, %v356
    %v358 = vpop.f32.mrb[0].mxu0
    %359 = vmatprep.mubr.f32.mxu0 0.0
    %360 = vmatmul.mubr.f32.gmra.mrb[0].mxu0 %v91
    %v361 = vpop.f32.mrb[0].mxu0
    %v362 = vadd.f32 %v148, %v361
    %v363 = vpop.f32.mrb[0].mxu0
    %364 = vmatprep.mubr.f32.mxu0 0.0
    %365 = vmatmul.mubr.f32.gmra.mrb[0].mxu0 %v92
    %v366 = vpop.f32.mrb[0].mxu0
    %v367 = vadd.f32 %v148, %v366
    %v368 = vpop.f32.mrb[0].mxu0
    %369 = vmatprep.mubr.f32.mxu0 0.0
    %370 = vmatmul.mubr.f32.gmra.mrb[0].mxu0 %v93
    %v371 = vpop.f32.mrb[0].mxu0
    %v372 = vadd.f32 %v148, %v371
    %v373 = vpop.f32.mrb[0].mxu0
    %374 = vmatprep.mubr.f32.mxu0 0.0
    %375 = vmatmul.mubr.f32.gmra.mrb[0].mxu0 %v94
    %v376 = vpop.f32.mrb[0].mxu0
    %v377 = vadd.f32 %v148, %v376
    %v378 = vpop.f32.mrb[0].mxu0
    %379 = vmatprep.mubr.f32.mxu0 0.0
    %380 = vmatmul.mubr.f32.gmra.mrb[0].mxu0 %v95
    %v381 = vpop.f32.mrb[0].mxu0
    %v382 = vadd.f32 %v148, %v381
    %v383 = vpop.f32.mrb[0].mxu0
    %384 = vmatprep.mubr.f32.mxu0 0.0
    %385 = vmatmul.mubr.f32.gmra.mrb[0].mxu0 %v96
    %v386 = vpop.f32.mrb[0].mxu0
    %v387 = vadd.f32 %v148, %v386
    %v388 = vpop.f32.mrb[0].mxu0
    %389 = vmatprep.mubr.f32.mxu0 0.0
    %390 = vmatmul.mubr.f32.gmra.mrb[0].mxu0 %v97
    %v391 = vpop.f32.mrb[0].mxu0
    %v392 = vadd.f32 %v148, %v391
    %v393 = vpop.f32.mrb[0].mxu0
    %394 = vmatprep.mubr.f32.mxu0 0.0
    %395 = vmatmul.mubr.f32.gmra.mrb[0].mxu0 %v98
    %v396 = vpop.f32.mrb[0].mxu0
    %v397 = vadd.f32 %v148, %v396
    %v398 = vpop.f32.mrb[0].mxu0
    %399 = vmatprep.mubr.f32.mxu0 0.0
    %400 = vmatmul.mubr.f32.gmra.mrb[0].mxu0 %v99
    %v401 = vpop.f32.mrb[0].mxu0
    %v402 = vadd.f32 %v148, %v401
    %v403 = vpop.f32.mrb[0].mxu0
    %404 = vmatprep.mubr.f32.mxu0 0.0
    %405 = vmatmul.mubr.f32.gmra.mrb[0].mxu0 %v100
    %v406 = vpop.f32.mrb[0].mxu0
    %v407 = vadd.f32 %v148, %v406
    %v408 = vpop.f32.mrb[0].mxu0
    %409 = vmatprep.mubr.f32.mxu0 0.0
    %410 = vmatmul.mubr.f32.gmra.mrb[0].mxu0 %v101
    %v411 = vpop.f32.mrb[0].mxu0
    %v412 = vadd.f32 %v148, %v411
    %v413 = vpop.f32.mrb[0].mxu0
    %414 = vmatprep.mubr.f32.mxu0 0.0
    %415 = vmatmul.mubr.f32.gmra.mrb[0].mxu0 %v102
    %v416 = vpop.f32.mrb[0].mxu0
    %v417 = vadd.f32 %v148, %v416
    %v418 = vpop.f32.mrb[0].mxu0
    %419 = vmatprep.mubr.f32.mxu0 0.0
    %420 = vmatmul.mubr.f32.gmra.mrb[0].mxu0 %v103
    %v421 = vpop.f32.mrb[0].mxu0
    %v422 = vadd.f32 %v148, %v421
    %v423 = vpop.f32.mrb[0].mxu0
    %424 = vmatprep.mubr.f32.mxu0 0.0
    %425 = vmatmul.mubr.f32.gmra.mrb[0].mxu0 %v104
    %v426 = vpop.f32.mrb[0].mxu0
    %v427 = vadd.f32 %v148, %v426
    %v428 = vpop.f32.mrb[0].mxu0
    %429 = vmatprep.mubr.f32.mxu0 0.0
    %430 = vmatmul.mubr.f32.gmra.mrb[0].mxu0 %v105
    %v431 = vpop.f32.mrb[0].mxu0
    %v432 = vadd.f32 %v148, %v431
    %v433 = vpop.f32.mrb[0].mxu0
    %434 = vmatprep.mubr.f32.mxu0 0.0
    %435 = vmatmul.mubr.f32.gmra.mrb[0].mxu0 %v106
    %v436 = vpop.f32.mrb[0].mxu0
    %v437 = vadd.f32 %v148, %v436
    %v438 = vpop.f32.mrb[0].mxu0
    %439 = vmatprep.mubr.f32.mxu0 0.0
    %440 = vmatmul.mubr.f32.gmra.mrb[0].mxu0 %v107
    %v441 = vpop.f32.mrb[0].mxu0
    %v442 = vadd.f32 %v148, %v441
    %v443 = vpop.f32.mrb[0].mxu0
    %444 = vmatprep.mubr.f32.mxu0 0.0
    %445 = vmatmul.mubr.f32.gmra.mrb[0].mxu0 %v108
    %v446 = vpop.f32.mrb[0].mxu0
    %v447 = vadd.f32 %v148, %v446
    %v448 = vpop.f32.mrb[0].mxu0
    %449 = vmatprep.mubr.f32.mxu0 0.0
    %450 = vmatmul.mubr.f32.gmra.mrb[0].mxu0 %v109
    %v451 = vpop.f32.mrb[0].mxu0
    %v452 = vadd.f32 %v148, %v451
    %v453 = vpop.f32.mrb[0].mxu0
    %454 = vmatprep.mubr.f32.mxu0 0.0
    %455 = vmatmul.mubr.f32.gmra.mrb[0].mxu0 %v110
    %v456 = vpop.f32.mrb[0].mxu0
    %v457 = vadd.f32 %v148, %v456
    %v458 = vpop.f32.mrb[0].mxu0
    %459 = vmatprep.mubr.f32.mxu0 0.0
    %460 = vmatmul.mubr.f32.gmra.mrb[0].mxu0 %v111
    %v461 = vpop.f32.mrb[0].mxu0
    %v462 = vadd.f32 %v148, %v461
    %v463 = vpop.f32.mrb[0].mxu0
    %464 = vmatprep.mubr.f32.mxu0 0.0
    %465 = vmatmul.mubr.f32.gmra.mrb[0].mxu0 %v112
    %v466 = vpop.f32.mrb[0].mxu0
    %v467 = vadd.f32 %v148, %v466
    %v468 = vpop.f32.mrb[0].mxu0
    %469 = vmatprep.mubr.f32.mxu0 0.0
    %470 = vmatmul.mubr.f32.gmra.mrb[0].mxu0 %v113
    %v471 = vpop.f32.mrb[0].mxu0
    %v472 = vadd.f32 %v148, %v471
    %v473 = vpop.f32.mrb[0].mxu0
    %474 = vmatprep.mubr.f32.mxu0 0.0
    %475 = vmatmul.mubr.f32.gmra.mrb[0].mxu0 %v114
    %v476 = vpop.f32.mrb[0].mxu0
    %v477 = vadd.f32 %v148, %v476
    %v478 = vpop.f32.mrb[0].mxu0
    %479 = vmatprep.mubr.f32.mxu0 0.0
    %480 = vmatmul.mubr.f32.gmra.mrb[0].mxu0 %v115
    %v481 = vpop.f32.mrb[0].mxu0
    %v482 = vadd.f32 %v148, %v481
    %v483 = vpop.f32.mrb[0].mxu0
    %484 = vmatprep.mubr.f32.mxu0 0.0
    %485 = vmatmul.mubr.f32.gmra.mrb[0].mxu0 %v116
    %v486 = vpop.f32.mrb[0].mxu0
    %v487 = vadd.f32 %v148, %v486
    %v488 = vpop.f32.mrb[0].mxu0
    %489 = vmatprep.mubr.f32.mxu0 0.0
    %490 = vmatmul.mubr.f32.gmra.mrb[0].mxu0 %v117
    %v491 = vpop.f32.mrb[0].mxu0
    %v492 = vadd.f32 %v148, %v491
    %v493 = vpop.f32.mrb[0].mxu0
    %494 = vmatprep.mubr.f32.mxu0 0.0
    %495 = vmatmul.mubr.f32.gmra.mrb[0].mxu0 %v118
    %v496 = vpop.f32.mrb[0].mxu0
    %v497 = vadd.f32 %v148, %v496
    %v498 = vpop.f32.mrb[0].mxu0
    %499 = vmatprep.mubr.f32.mxu0 0.0
    %500 = vmatmul.mubr.f32.gmra.mrb[0].mxu0 %v119
    %v501 = vpop.f32.mrb[0].mxu0
    %v502 = vadd.f32 %v148, %v501
    %v503 = vpop.f32.mrb[0].mxu0
    %504 = vmatprep.mubr.f32.mxu0 0.0
    %505 = vmatmul.mubr.f32.gmra.mrb[0].mxu0 %v120
    %v506 = vpop.f32.mrb[0].mxu0
    %v507 = vadd.f32 %v148, %v506
    %v508 = vpop.f32.mrb[0].mxu0
    %509 = vmatprep.mubr.f32.mxu0 0.0
    %510 = vmatmul.mubr.f32.gmra.mrb[0].mxu0 %v121
    %v511 = vpop.f32.mrb[0].mxu0
    %v512 = vadd.f32 %v148, %v511
    %v513 = vpop.f32.mrb[0].mxu0
    %514 = vmatprep.mubr.f32.mxu0 0.0
    %515 = vmatmul.mubr.f32.gmra.mrb[0].mxu0 %v122
    %v516 = vpop.f32.mrb[0].mxu0
    %v517 = vadd.f32 %v148, %v516
    %v518 = vpop.f32.mrb[0].mxu0
    %519 = vmatprep.mubr.f32.mxu0 0.0
    %520 = vmatmul.mubr.f32.gmra.mrb[0].mxu0 %v123
    %v521 = vpop.f32.mrb[0].mxu0
    %v522 = vadd.f32 %v148, %v521
    %v523 = vpop.f32.mrb[0].mxu0
    %524 = vmatprep.mubr.f32.mxu0 0.0
    %525 = vmatmul.mubr.f32.gmra.mrb[0].mxu0 %v124
    %v526 = vpop.f32.mrb[0].mxu0
    %v527 = vadd.f32 %v148, %v526
    %v528 = vpop.f32.mrb[0].mxu0
    %529 = vmatprep.mubr.f32.mxu0 0.0
    %530 = vmatmul.mubr.f32.gmra.mrb[0].mxu0 %v125
    %v531 = vpop.f32.mrb[0].mxu0
    %v532 = vadd.f32 %v148, %v531
    %v533 = vpop.f32.mrb[0].mxu0
    %534 = vdwg.mxu0
    %v535 = vtanh.pop %v217
    %v536 = vtanh.pop %v222
    %v537 = vtanh.pop %v227
    %v538 = vtanh.pop %v232
    %v539 = vtanh.pop %v237
    %v540 = vtanh.pop %v242
    %v541 = vtanh.pop %v247
    %v542 = vtanh.pop %v252
    %v543 = vtanh.pop %v257
    %v544 = vtanh.pop %v262
    %v545 = vtanh.pop %v267
    %v546 = vtanh.pop %v272
    %v547 = vtanh.pop %v277
    %v548 = vtanh.pop %v282
    %v549 = vtanh.pop %v287
    %v550 = vtanh.pop %v292
    %v551 = vtanh.pop %v297
    %v552 = vtanh.pop %v302
    %v553 = vtanh.pop %v307
    %v554 = vtanh.pop %v312
    %v555 = vtanh.pop %v317
    %v556 = vtanh.pop %v322
    %v557 = vtanh.pop %v327
    %v558 = vtanh.pop %v332
    %v559 = vtanh.pop %v337
    %v560 = vtanh.pop %v342
    %v561 = vtanh.pop %v347
    %v562 = vtanh.pop %v352
    %v563 = vtanh.pop %v357
    %v564 = vtanh.pop %v362
    %v565 = vtanh.pop %v367
    %v566 = vtanh.pop %v372
    %v567 = vtanh.pop %v377
    %v568 = vtanh.pop %v382
    %v569 = vtanh.pop %v387
    %v570 = vtanh.pop %v392
    %v571 = vtanh.pop %v397
    %v572 = vtanh.pop %v402
    %v573 = vtanh.pop %v407
    %v574 = vtanh.pop %v412
    %v575 = vtanh.pop %v417
    %v576 = vtanh.pop %v422
    %v577 = vtanh.pop %v427
    %v578 = vtanh.pop %v432
    %v579 = vtanh.pop %v437
    %v580 = vtanh.pop %v442
    %v581 = vtanh.pop %v447
    %v582 = vtanh.pop %v452
    %v583 = vtanh.pop %v457
    %v584 = vtanh.pop %v462
    %v585 = vtanh.pop %v467
    %v586 = vtanh.pop %v472
    %v587 = vtanh.pop %v477
    %v588 = vtanh.pop %v482
    %v589 = vtanh.pop %v487
    %v590 = vtanh.pop %v492
    %v591 = vtanh.pop %v497
    %v592 = vtanh.pop %v502
    %v593 = vtanh.pop %v507
    %v594 = vtanh.pop %v512
    %v595 = vtanh.pop %v517
    %v596 = vtanh.pop %v522
    %v597 = vtanh.pop %v527
    %v598 = vtanh.pop %v532
    %v599 = vsub.f32 %v535, %v567
    %v600 = vsub.f32 %v536, %v568
    %v601 = vsub.f32 %v537, %v569
    %v602 = vsub.f32 %v538, %v570
    %v603 = vsub.f32 %v539, %v571
    %v604 = vsub.f32 %v540, %v572
    %v605 = vsub.f32 %v541, %v573
    %v606 = vsub.f32 %v542, %v574
    %v607 = vsub.f32 %v543, %v575
    %v608 = vsub.f32 %v544, %v576
    %v609 = vsub.f32 %v545, %v577
    %v610 = vsub.f32 %v546, %v578
    %v611 = vsub.f32 %v547, %v579
    %v612 = vsub.f32 %v548, %v580
    %v613 = vsub.f32 %v549, %v581
    %v614 = vsub.f32 %v550, %v582
    %v615 = vsub.f32 %v551, %v583
    %v616 = vsub.f32 %v552, %v584
    %v617 = vsub.f32 %v553, %v585
    %v618 = vsub.f32 %v554, %v586
    %v619 = vsub.f32 %v555, %v587
    %v620 = vsub.f32 %v556, %v588
    %v621 = vsub.f32 %v557, %v589
    %v622 = vsub.f32 %v558, %v590
    %v623 = vsub.f32 %v559, %v591
    %v624 = vsub.f32 %v560, %v592
    %v625 = vsub.f32 %v561, %v593
    %v626 = vsub.f32 %v562, %v594
    %v627 = vsub.f32 %v563, %v595
    %v628 = vsub.f32 %v564, %v596
    %v629 = vsub.f32 %v565, %v597
    %v630 = vsub.f32 %v566, %v598
    %v632 = vlaneseq
    %v633 = vshrl.u32 %v632, 7
    %v634 = vsub.s32 0, %v633
    %v635 = vrot.slane %v127, %v634
    %v637 = vmul.f32 %v599, %v635
    %v638 = vmul.f32 %v600, %v635
    %v639 = vmul.f32 %v601, %v635
    %v640 = vmul.f32 %v602, %v635
    %v641 = vmul.f32 %v603, %v635
    %v642 = vmul.f32 %v604, %v635
    %v643 = vmul.f32 %v605, %v635
    %v644 = vmul.f32 %v606, %v635
    %v645 = vmul.f32 %v607, %v635
    %v646 = vmul.f32 %v608, %v635
    %v647 = vmul.f32 %v609, %v635
    %v648 = vmul.f32 %v610, %v635
    %v649 = vmul.f32 %v611, %v635
    %v650 = vmul.f32 %v612, %v635
    %v651 = vmul.f32 %v613, %v635
    %v652 = vmul.f32 %v614, %v635
    %v653 = vmul.f32 %v615, %v635
    %v654 = vmul.f32 %v616, %v635
    %v655 = vmul.f32 %v617, %v635
    %v656 = vmul.f32 %v618, %v635
    %v657 = vmul.f32 %v619, %v635
    %v658 = vmul.f32 %v620, %v635
    %v659 = vmul.f32 %v621, %v635
    %v660 = vmul.f32 %v622, %v635
    %v661 = vmul.f32 %v623, %v635
    %v662 = vmul.f32 %v624, %v635
    %v663 = vmul.f32 %v625, %v635
    %v664 = vmul.f32 %v626, %v635
    %v665 = vmul.f32 %v627, %v635
    %v666 = vmul.f32 %v628, %v635
    %v667 = vmul.f32 %v629, %v635
    %v668 = vmul.f32 %v630, %v635
    %669 = vadd.xlane.f32.xlu0 %v637
    %v670 = vpop.xlane.xlu0 %669
    %671 = vadd.xlane.f32.xlu0 %v638
    %v672 = vpop.xlane.xlu0 %671
    %673 = vadd.xlane.f32.xlu0 %v639
    %v674 = vpop.xlane.xlu0 %673
    %675 = vadd.xlane.f32.xlu0 %v640
    %v676 = vpop.xlane.xlu0 %675
    %677 = vadd.xlane.f32.xlu0 %v641
    %v678 = vpop.xlane.xlu0 %677
    %679 = vadd.xlane.f32.xlu0 %v642
    %v680 = vpop.xlane.xlu0 %679
    %681 = vadd.xlane.f32.xlu0 %v643
    %v682 = vpop.xlane.xlu0 %681
    %683 = vadd.xlane.f32.xlu0 %v644
    %v684 = vpop.xlane.xlu0 %683
    %685 = vadd.xlane.f32.xlu0 %v645
    %v686 = vpop.xlane.xlu0 %685
    %687 = vadd.xlane.f32.xlu0 %v646
    %v688 = vpop.xlane.xlu0 %687
    %689 = vadd.xlane.f32.xlu0 %v647
    %v690 = vpop.xlane.xlu0 %689
    %691 = vadd.xlane.f32.xlu0 %v648
    %v692 = vpop.xlane.xlu0 %691
    %693 = vadd.xlane.f32.xlu0 %v649
    %v694 = vpop.xlane.xlu0 %693
    %695 = vadd.xlane.f32.xlu0 %v650
    %v696 = vpop.xlane.xlu0 %695
    %697 = vadd.xlane.f32.xlu0 %v651
    %v698 = vpop.xlane.xlu0 %697
    %699 = vadd.xlane.f32.xlu0 %v652
    %v700 = vpop.xlane.xlu0 %699
    %701 = vadd.xlane.f32.xlu0 %v653
    %v702 = vpop.xlane.xlu0 %701
    %703 = vadd.xlane.f32.xlu0 %v654
    %v704 = vpop.xlane.xlu0 %703
    %705 = vadd.xlane.f32.xlu0 %v655
    %v706 = vpop.xlane.xlu0 %705
    %707 = vadd.xlane.f32.xlu0 %v656
    %v708 = vpop.xlane.xlu0 %707
    %709 = vadd.xlane.f32.xlu0 %v657
    %v710 = vpop.xlane.xlu0 %709
    %711 = vadd.xlane.f32.xlu0 %v658
    %v712 = vpop.xlane.xlu0 %711
    %713 = vadd.xlane.f32.xlu0 %v659
    %v714 = vpop.xlane.xlu0 %713
    %715 = vadd.xlane.f32.xlu0 %v660
    %v716 = vpop.xlane.xlu0 %715
    %717 = vadd.xlane.f32.xlu0 %v661
    %v718 = vpop.xlane.xlu0 %717
    %719 = vadd.xlane.f32.xlu0 %v662
    %v720 = vpop.xlane.xlu0 %719
    %721 = vadd.xlane.f32.xlu0 %v663
    %v722 = vpop.xlane.xlu0 %721
    %723 = vadd.xlane.f32.xlu0 %v664
    %v724 = vpop.xlane.xlu0 %723
    %725 = vadd.xlane.f32.xlu0 %v665
    %v726 = vpop.xlane.xlu0 %725
    %727 = vadd.xlane.f32.xlu0 %v666
    %v728 = vpop.xlane.xlu0 %727
    %729 = vadd.xlane.f32.xlu0 %v667
    %v730 = vpop.xlane.xlu0 %729
    %731 = vadd.xlane.f32.xlu0 %v668
    %v732 = vpop.xlane.xlu0 %731
    %v733 = vmul.f32 %v670, 0.5
    %v734 = vmul.f32 %v672, 0.5
    %v735 = vmul.f32 %v674, 0.5
    %v736 = vmul.f32 %v676, 0.5
    %v737 = vmul.f32 %v678, 0.5
    %v738 = vmul.f32 %v680, 0.5
    %v739 = vmul.f32 %v682, 0.5
    %v740 = vmul.f32 %v684, 0.5
    %v741 = vmul.f32 %v686, 0.5
    %v742 = vmul.f32 %v688, 0.5
    %v743 = vmul.f32 %v690, 0.5
    %v744 = vmul.f32 %v692, 0.5
    %v745 = vmul.f32 %v694, 0.5
    %v746 = vmul.f32 %v696, 0.5
    %v747 = vmul.f32 %v698, 0.5
    %v748 = vmul.f32 %v700, 0.5
    %v749 = vmul.f32 %v702, 0.5
    %v750 = vmul.f32 %v704, 0.5
    %v751 = vmul.f32 %v706, 0.5
    %v752 = vmul.f32 %v708, 0.5
    %v753 = vmul.f32 %v710, 0.5
    %v754 = vmul.f32 %v712, 0.5
    %v755 = vmul.f32 %v714, 0.5
    %v756 = vmul.f32 %v716, 0.5
    %v757 = vmul.f32 %v718, 0.5
    %v758 = vmul.f32 %v720, 0.5
    %v759 = vmul.f32 %v722, 0.5
    %v760 = vmul.f32 %v724, 0.5
    %v761 = vmul.f32 %v726, 0.5
    %v762 = vmul.f32 %v728, 0.5
    %v763 = vmul.f32 %v730, 0.5
    %v764 = vmul.f32 %v732, 0.5
    %v765 = vtanh.pop %v733
    %v766 = vtanh.pop %v734
    %v767 = vtanh.pop %v735
    %v768 = vtanh.pop %v736
    %v769 = vtanh.pop %v737
    %v770 = vtanh.pop %v738
    %v771 = vtanh.pop %v739
    %v772 = vtanh.pop %v740
    %v773 = vtanh.pop %v741
    %v774 = vtanh.pop %v742
    %v775 = vtanh.pop %v743
    %v776 = vtanh.pop %v744
    %v777 = vtanh.pop %v745
    %v778 = vtanh.pop %v746
    %v779 = vtanh.pop %v747
    %v780 = vtanh.pop %v748
    %v781 = vtanh.pop %v749
    %v782 = vtanh.pop %v750
    %v783 = vtanh.pop %v751
    %v784 = vtanh.pop %v752
    %v785 = vtanh.pop %v753
    %v786 = vtanh.pop %v754
    %v787 = vtanh.pop %v755
    %v788 = vtanh.pop %v756
    %v789 = vtanh.pop %v757
    %v790 = vtanh.pop %v758
    %v791 = vtanh.pop %v759
    %v792 = vtanh.pop %v760
    %v793 = vtanh.pop %v761
    %v794 = vtanh.pop %v762
    %v795 = vtanh.pop %v763
    %v796 = vtanh.pop %v764
    %v797 = vadd.f32 %v765, 1.0
    %v798 = vadd.f32 %v766, 1.0
    %v799 = vadd.f32 %v767, 1.0
    %v800 = vadd.f32 %v768, 1.0
    %v801 = vadd.f32 %v769, 1.0
    %v802 = vadd.f32 %v770, 1.0
    %v803 = vadd.f32 %v771, 1.0
    %v804 = vadd.f32 %v772, 1.0
    %v805 = vadd.f32 %v773, 1.0
    %v806 = vadd.f32 %v774, 1.0
    %v807 = vadd.f32 %v775, 1.0
    %v808 = vadd.f32 %v776, 1.0
    %v809 = vadd.f32 %v777, 1.0
    %v810 = vadd.f32 %v778, 1.0
    %v811 = vadd.f32 %v779, 1.0
    %v812 = vadd.f32 %v780, 1.0
    %v813 = vadd.f32 %v781, 1.0
    %v814 = vadd.f32 %v782, 1.0
    %v815 = vadd.f32 %v783, 1.0
    %v816 = vadd.f32 %v784, 1.0
    %v817 = vadd.f32 %v785, 1.0
    %v818 = vadd.f32 %v786, 1.0
    %v819 = vadd.f32 %v787, 1.0
    %v820 = vadd.f32 %v788, 1.0
    %v821 = vadd.f32 %v789, 1.0
    %v822 = vadd.f32 %v790, 1.0
    %v823 = vadd.f32 %v791, 1.0
    %v824 = vadd.f32 %v792, 1.0
    %v825 = vadd.f32 %v793, 1.0
    %v826 = vadd.f32 %v794, 1.0
    %v827 = vadd.f32 %v795, 1.0
    %v828 = vadd.f32 %v796, 1.0
    %v829 = vmul.f32 %v797, 0.5
    %v830 = vmul.f32 %v798, 0.5
    %v831 = vmul.f32 %v799, 0.5
    %v832 = vmul.f32 %v800, 0.5
    %v833 = vmul.f32 %v801, 0.5
    %v834 = vmul.f32 %v802, 0.5
    %v835 = vmul.f32 %v803, 0.5
    %v836 = vmul.f32 %v804, 0.5
    %v837 = vmul.f32 %v805, 0.5
    %v838 = vmul.f32 %v806, 0.5
    %v839 = vmul.f32 %v807, 0.5
    %v840 = vmul.f32 %v808, 0.5
    %v841 = vmul.f32 %v809, 0.5
    %v842 = vmul.f32 %v810, 0.5
    %v843 = vmul.f32 %v811, 0.5
    %v844 = vmul.f32 %v812, 0.5
    %v845 = vmul.f32 %v813, 0.5
    %v846 = vmul.f32 %v814, 0.5
    %v847 = vmul.f32 %v815, 0.5
    %v848 = vmul.f32 %v816, 0.5
    %v849 = vmul.f32 %v817, 0.5
    %v850 = vmul.f32 %v818, 0.5
    %v851 = vmul.f32 %v819, 0.5
    %v852 = vmul.f32 %v820, 0.5
    %v853 = vmul.f32 %v821, 0.5
    %v854 = vmul.f32 %v822, 0.5
    %v855 = vmul.f32 %v823, 0.5
    %v856 = vmul.f32 %v824, 0.5
    %v857 = vmul.f32 %v825, 0.5
    %v858 = vmul.f32 %v826, 0.5
    %v859 = vmul.f32 %v827, 0.5
    %v860 = vmul.f32 %v828, 0.5
    %v861 = vsub.f32 1.0, %v829
    %v862 = vsub.f32 1.0, %v830
    %v863 = vsub.f32 1.0, %v831
    %v864 = vsub.f32 1.0, %v832
    %v865 = vsub.f32 1.0, %v833
    %v866 = vsub.f32 1.0, %v834
    %v867 = vsub.f32 1.0, %v835
    %v868 = vsub.f32 1.0, %v836
    %v869 = vsub.f32 1.0, %v837
    %v870 = vsub.f32 1.0, %v838
    %v871 = vsub.f32 1.0, %v839
    %v872 = vsub.f32 1.0, %v840
    %v873 = vsub.f32 1.0, %v841
    %v874 = vsub.f32 1.0, %v842
    %v875 = vsub.f32 1.0, %v843
    %v876 = vsub.f32 1.0, %v844
    %v877 = vsub.f32 1.0, %v845
    %v878 = vsub.f32 1.0, %v846
    %v879 = vsub.f32 1.0, %v847
    %v880 = vsub.f32 1.0, %v848
    %v881 = vsub.f32 1.0, %v849
    %v882 = vsub.f32 1.0, %v850
    %v883 = vsub.f32 1.0, %v851
    %v884 = vsub.f32 1.0, %v852
    %v885 = vsub.f32 1.0, %v853
    %v886 = vsub.f32 1.0, %v854
    %v887 = vsub.f32 1.0, %v855
    %v888 = vsub.f32 1.0, %v856
    %v889 = vsub.f32 1.0, %v857
    %v890 = vsub.f32 1.0, %v858
    %v891 = vsub.f32 1.0, %v859
    %v892 = vsub.f32 1.0, %v860
    %v893 = vmul.f32 %v829, %v62
    %v894 = vmul.f32 %v830, %v63
    %v895 = vmul.f32 %v831, %v64
    %v896 = vmul.f32 %v832, %v65
    %v897 = vmul.f32 %v833, %v66
    %v898 = vmul.f32 %v834, %v67
    %v899 = vmul.f32 %v835, %v68
    %v900 = vmul.f32 %v836, %v69
    %v901 = vmul.f32 %v837, %v70
    %v902 = vmul.f32 %v838, %v71
    %v903 = vmul.f32 %v839, %v72
    %v904 = vmul.f32 %v840, %v73
    %v905 = vmul.f32 %v841, %v74
    %v906 = vmul.f32 %v842, %v75
    %v907 = vmul.f32 %v843, %v76
    %v908 = vmul.f32 %v844, %v77
    %v909 = vmul.f32 %v845, %v78
    %v910 = vmul.f32 %v846, %v79
    %v911 = vmul.f32 %v847, %v80
    %v912 = vmul.f32 %v848, %v81
    %v913 = vmul.f32 %v849, %v82
    %v914 = vmul.f32 %v850, %v83
    %v915 = vmul.f32 %v851, %v84
    %v916 = vmul.f32 %v852, %v85
    %v917 = vmul.f32 %v853, %v86
    %v918 = vmul.f32 %v854, %v87
    %v919 = vmul.f32 %v855, %v88
    %v920 = vmul.f32 %v856, %v89
    %v921 = vmul.f32 %v857, %v90
    %v922 = vmul.f32 %v858, %v91
    %v923 = vmul.f32 %v859, %v92
    %v924 = vmul.f32 %v860, %v93
    %v925 = vmul.f32 %v861, %v94
    %v926 = vmul.f32 %v862, %v95
    %v927 = vmul.f32 %v863, %v96
    %v928 = vmul.f32 %v864, %v97
    %v929 = vmul.f32 %v865, %v98
    %v930 = vmul.f32 %v866, %v99
    %v931 = vmul.f32 %v867, %v100
    %v932 = vmul.f32 %v868, %v101
    %v933 = vmul.f32 %v869, %v102
    %v934 = vmul.f32 %v870, %v103
    %v935 = vmul.f32 %v871, %v104
    %v936 = vmul.f32 %v872, %v105
    %v937 = vmul.f32 %v873, %v106
    %v938 = vmul.f32 %v874, %v107
    %v939 = vmul.f32 %v875, %v108
    %v940 = vmul.f32 %v876, %v109
    %v941 = vmul.f32 %v877, %v110
    %v942 = vmul.f32 %v878, %v111
    %v943 = vmul.f32 %v879, %v112
    %v944 = vmul.f32 %v880, %v113
    %v945 = vmul.f32 %v881, %v114
    %v946 = vmul.f32 %v882, %v115
    %v947 = vmul.f32 %v883, %v116
    %v948 = vmul.f32 %v884, %v117
    %v949 = vmul.f32 %v885, %v118
    %v950 = vmul.f32 %v886, %v119
    %v951 = vmul.f32 %v887, %v120
    %v952 = vmul.f32 %v888, %v121
    %v953 = vmul.f32 %v889, %v122
    %v954 = vmul.f32 %v890, %v123
    %v955 = vmul.f32 %v891, %v124
    %v956 = vmul.f32 %v892, %v125
    %v957 = vadd.f32 %v893, %v925
    %v958 = vadd.f32 %v894, %v926
    %v959 = vadd.f32 %v895, %v927
    %v960 = vadd.f32 %v896, %v928
    %v961 = vadd.f32 %v897, %v929
    %v962 = vadd.f32 %v898, %v930
    %v963 = vadd.f32 %v899, %v931
    %v964 = vadd.f32 %v900, %v932
    %v965 = vadd.f32 %v901, %v933
    %v966 = vadd.f32 %v902, %v934
    %v967 = vadd.f32 %v903, %v935
    %v968 = vadd.f32 %v904, %v936
    %v969 = vadd.f32 %v905, %v937
    %v970 = vadd.f32 %v906, %v938
    %v971 = vadd.f32 %v907, %v939
    %v972 = vadd.f32 %v908, %v940
    %v973 = vadd.f32 %v909, %v941
    %v974 = vadd.f32 %v910, %v942
    %v975 = vadd.f32 %v911, %v943
    %v976 = vadd.f32 %v912, %v944
    %v977 = vadd.f32 %v913, %v945
    %v978 = vadd.f32 %v914, %v946
    %v979 = vadd.f32 %v915, %v947
    %v980 = vadd.f32 %v916, %v948
    %v981 = vadd.f32 %v917, %v949
    %v982 = vadd.f32 %v918, %v950
    %v983 = vadd.f32 %v919, %v951
    %v984 = vadd.f32 %v920, %v952
    %v985 = vadd.f32 %v921, %v953
    %v986 = vadd.f32 %v922, %v954
    %v987 = vadd.f32 %v923, %v955
    %v988 = vadd.f32 %v924, %v956
    %989 = vst [vmem:[#allocation8] sm:$0xff] %v957
    %990 = vst [vmem:[#allocation8 + $0x8] sm:$0xff] %v958
    %991 = vst [vmem:[#allocation8 + $0x10] sm:$0xff] %v959
    %992 = vst [vmem:[#allocation8 + $0x18] sm:$0xff] %v960
    %993 = vst [vmem:[#allocation8 + $0x20] sm:$0xff] %v961
    %994 = vst [vmem:[#allocation8 + $0x28] sm:$0xff] %v962
    %995 = vst [vmem:[#allocation8 + $0x30] sm:$0xff] %v963
    %996 = vst [vmem:[#allocation8 + $0x38] sm:$0xff] %v964
    %997 = vst [vmem:[#allocation8 + $0x40] sm:$0xff] %v965
    %998 = vst [vmem:[#allocation8 + $0x48] sm:$0xff] %v966
    %999 = vst [vmem:[#allocation8 + $0x50] sm:$0xff] %v967
    %1000 = vst [vmem:[#allocation8 + $0x58] sm:$0xff] %v968
    %1001 = vst [vmem:[#allocation8 + $0x60] sm:$0xff] %v969
    %1002 = vst [vmem:[#allocation8 + $0x68] sm:$0xff] %v970
    %1003 = vst [vmem:[#allocation8 + $0x70] sm:$0xff] %v971
    %1004 = vst [vmem:[#allocation8 + $0x78] sm:$0xff] %v972
    %1005 = vst [vmem:[#allocation8 + $0x80] sm:$0xff] %v973
    %1006 = vst [vmem:[#allocation8 + $0x88] sm:$0xff] %v974
    %1007 = vst [vmem:[#allocation8 + $0x90] sm:$0xff] %v975
    %1008 = vst [vmem:[#allocation8 + $0x98] sm:$0xff] %v976
    %1009 = vst [vmem:[#allocation8 + $0xa0] sm:$0xff] %v977
    %1010 = vst [vmem:[#allocation8 + $0xa8] sm:$0xff] %v978
    %1011 = vst [vmem:[#allocation8 + $0xb0] sm:$0xff] %v979
    %1012 = vst [vmem:[#allocation8 + $0xb8] sm:$0xff] %v980
    %1013 = vst [vmem:[#allocation8 + $0xc0] sm:$0xff] %v981
    %1014 = vst [vmem:[#allocation8 + $0xc8] sm:$0xff] %v982
    %1015 = vst [vmem:[#allocation8 + $0xd0] sm:$0xff] %v983
    %1016 = vst [vmem:[#allocation8 + $0xd8] sm:$0xff] %v984
    %1017 = vst [vmem:[#allocation8 + $0xe0] sm:$0xff] %v985
    %1018 = vst [vmem:[#allocation8 + $0xe8] sm:$0xff] %v986
    %1019 = vst [vmem:[#allocation8 + $0xf0] sm:$0xff] %v987
    %1020 = vst [vmem:[#allocation8 + $0xf8] sm:$0xff] %v988
    // Predicated region
    $region34: #{tpu_custom_call.1} parent=1 // pred_check
      _
    $region35: #{tpu_custom_call.1} parent=1 // pred_check_branch
      %1022 = sbr.rel (0) target = $region37
    $region36: #{tpu_custom_call.1} parent=1 // pred_region
      %s1024 = ssub.s32 4096, 4096
      %1025 = vsyncadd [#allocation4], %s1024
      %s1026 = sshll.u32 [#allocation8], 4
      %s1027 = int_to_ptr.vmem [resolvable:$true] %s1026
      %1032 = dma.vmem_to_hbm [thread:$0]  %s1027, 4096, %s5, [#allocation4], 128, 128, 8
    $region37: #{tpu_custom_call.1} parent=1 // pred_fallthru
      _
    // Predicated region
    $region38: #{tpu_custom_call.1} parent=1 // pred_check
      _
    $region39: #{tpu_custom_call.1} parent=1 // pred_check_branch
      %1034 = sbr.rel (0) target = $region41
    $region40: #{tpu_custom_call.1} parent=1 // pred_region
      %1035 = dma.done [#allocation4], 4096
    $region41: #{tpu_custom_call.1} parent=1 // pred_fallthru
      _
    %1036 = vsyncpa [#allocation3], 1
    %1037 = vsyncpa [#allocation6], 1
    %1038 = vsyncpa [#allocation4], 1

</llo_original>
